<compile_context>
chip_gen: v7x
topology: tpu7x:2x2x1
jax: 0.10.0
libtpu: 0.0.40
codegen_flags: <defaults>
</compile_context>

<pallas_src>
import functools

import jax
import jax.numpy as jnp
from jax import lax
from jax.experimental import pallas as pl
from jax.experimental.pallas import tpu as pltpu


# 512-row tiles already sit at the ~85%+ HBM-roofline regime; also keeps the
# tile_r x tile_r diag-slab / mask temporaries small.
_MAX_TILE_R = 512


def _round_up(x: int, m: int) -> int:
    return ((x + m - 1) // m) * m


def _cdiv(a: int, b: int) -> int:
    return (a + b - 1) // b


def _cross_en0_kernel(sim_ref, nce_ref, *, tile_r, use_slab):
    """One row tile (tile_r, cols) -> lane-dense per-row nce block (1, 1, tile_r)."""
    i = pl.program_id(0)
    x = sim_ref[...].astype(jnp.float32)                            # (tile_r, cols)

    # Row-wise logsumexp over ALL columns (the softmax denominator).
    row_max = jnp.max(x, axis=-1, keepdims=True)                    # (tile_r, 1)
    lse = row_max + jnp.log(
        jnp.sum(jnp.exp(x - row_max), axis=-1, keepdims=True))      # (tile_r, 1)

    r_loc = lax.broadcasted_iota(jnp.int32, (tile_r, tile_r), 0)
    c_loc = lax.broadcasted_iota(jnp.int32, (tile_r, tile_r), 1)
    eye = r_loc == c_loc                                             # (tile_r, tile_r)

    if use_slab:
        # Diagonal entries of this row tile live in global columns
        # [i*tile_r, (i+1)*tile_r).  The row tile already holds ALL columns (column
        # offset 0), so slice the square diagonal slab straight out of VMEM — no
        # second HBM read.  tile_r % 128 == 0 in this mode, so the slice is aligned.
        col0 = pl.multiple_of(i * tile_r, 128)
        slab = sim_ref[:, pl.ds(col0, tile_r)].astype(jnp.float32)   # (tile_r, tile_r)
        # nce[j] = lse[j] - slab[j, j]; reducing the diagonal-masked (lse - slab) over
        # the sublane axis lands the result lane-dense directly (no relayout).
        nce_lane = jnp.sum(jnp.where(eye, lse - slab, 0.0),
                           axis=0, keepdims=True)                    # (1, tile_r)
    else:
        # Fallback for small / non-128-aligned row tiles: full-width diagonal mask.
        cols = x.shape[-1]
        row_global = i * tile_r + lax.broadcasted_iota(jnp.int32, (tile_r, 1), 0)
        col_idx = lax.broadcasted_iota(jnp.int32, (tile_r, cols), 1)
        diag = jnp.sum(jnp.where(col_idx == row_global, x, 0.0),
                       axis=-1, keepdims=True)                       # (tile_r, 1)
        nce_col = lse - diag                                         # (tile_r, 1)
        # Lane-dense writeback via the same masked-reduce trick.
        nce_lane = jnp.sum(jnp.where(eye, nce_col, 0.0),
                           axis=0, keepdims=True)                    # (1, tile_r)

    nce_ref[...] = nce_lane[None]                                    # (1, 1, tile_r)


def cross_en0(sim_matrix: jax.Array, b: int) -> jax.Array:
    """Pallas implementation of CrossEn0.forward(sim_matrix, b) -> scalar loss."""
    b = int(b)
    rows, cols = sim_matrix.shape
    assert 0 < b <= rows and b <= cols, (b, rows, cols)
    itemsize = jnp.dtype(sim_matrix.dtype).itemsize

    # Generation-aware VMEM sizing (v7x: 64 MiB/TC; v5e/v6e: 128 MiB).
    try:
        vmem_cap = int(pltpu.get_tpu_info().vmem_capacity_bytes)
    except Exception:
        vmem_cap = 64 << 20                      # conservative (v7x) fallback
    vmem_limit_cap = min(vmem_cap * 3 // 4, 96 << 20)      # ~48 MiB v7x, 96 MiB v5e/v6e
    vmem_budget = max(8 << 20, vmem_limit_cap - (8 << 20))  # per-tile working-set budget

    def tile_bytes(tr: int) -> int:
        # double-buffered input tile + in-kernel f32 temporaries (f32 upcast copy,
        # exp(x - max) intermediate) + square diag slab / iota masks.
        return (2 * tr * cols * itemsize
                + 3 * tr * cols * 4
                + 4 * tr * tr * 4)

    b8 = _round_up(b, 8)
    if b8 < 128:
        tile_r, use_slab = b8, False
    else:
        cands = [tr for tr in range(128, min(_round_up(b, 128), _MAX_TILE_R) + 1, 128)
                 if tile_bytes(tr) <= vmem_budget]
        if cands:
            # Minimize rows fetched past b (dead pad rows are wasted HBM traffic),
            # tie-break to the larger tile (fewer ~0.35us grid steps).
            tile_r = min(cands, key=lambda tr: (_cdiv(b, tr) * tr - b, -tr))
            # Slab slice must stay inside the matrix columns; else use full-width mask.
            use_slab = (_cdiv(b, tile_r) * tile_r <= cols)
        else:
            # TODO(synk): extremely wide matrices need a column-tiled online-logsumexp
            # reduction axis; degrade to the tallest multiple-of-8 row tile that fits.
            per_row = 2 * cols * itemsize + 3 * cols * 4
            tile_r = max(8, min(b8, (vmem_budget // per_row) // 8 * 8))
            use_slab = False

    n_tiles = _cdiv(b, tile_r)

    vmem_need = tile_bytes(tile_r) + (4 << 20)
    vmem_limit = int(min(max(vmem_need, 32 << 20), vmem_limit_cap))

    kernel = functools.partial(_cross_en0_kernel, tile_r=tile_r, use_slab=use_slab)

    nce = pl.pallas_call(
        kernel,
        out_shape=jax.ShapeDtypeStruct((n_tiles, 1, tile_r), jnp.float32),
        grid=(n_tiles,),
        in_specs=[pl.BlockSpec((tile_r, cols), lambda i: (i, 0))],
        out_specs=pl.BlockSpec((1, 1, tile_r), lambda i: (i, 0, 0)),
        compiler_params=pltpu.CompilerParams(
            # Row tiles are fully independent -> shard across TensorCores on v7x.
            dimension_semantics=("parallel",),
            vmem_limit_bytes=vmem_limit,
        ),
    )(sim_matrix)

    # Final mean over the first b rows (b floats) in JAX; pad rows (>= b) within the
    # last tile are simply dropped, so they never bias the result.
    return jnp.sum(nce.reshape(-1)[:b]) / jnp.float32(b)


def _reference(sim_matrix, b):
    logpt = jax.nn.log_softmax(sim_matrix[:b, :].astype(jnp.float32), axis=-1)
    diag = jnp.diagonal(logpt[:, :b])
    return jnp.mean(-diag)


if __name__ == "__main__":
    key = jax.random.PRNGKey(0)
    k1, k2 = jax.random.split(key)

    # Small case (exercises the full-width fallback path).
    sim_small = jax.random.normal(k1, (8, 12), dtype=jnp.float32)
    b_small = 6
    loss_small = jax.block_until_ready(cross_en0(sim_small, b_small))
    ref_small = _reference(sim_small, b_small)
    assert jnp.allclose(loss_small, ref_small, atol=1e-4, rtol=1e-4), (loss_small, ref_small)

    # Larger case (exercises the row-tiled, in-VMEM diagonal-slab path).
    sim_big = jax.random.normal(k2, (512, 640), dtype=jnp.float32)
    b_big = 384
    loss_big = jax.block_until_ready(cross_en0(sim_big, b_big))
    ref_big = _reference(sim_big, b_big)
    assert jnp.allclose(loss_big, ref_big, atol=1e-4, rtol=1e-4), (loss_big, ref_big)

    print("KERNEL_OK")
</pallas_src>

<mosaic_0001>
module attributes {stable_mosaic.version = 11 : i64} {
  func.func @_cross_en0_kernel(%arg0: i32, %arg1: memref<8x12xf32, #tpu.memory_space<vmem>>, %arg2: memref<1x1x8xf32, #tpu.memory_space<vmem>>) attributes {dimension_semantics = [#tpu.dimension_semantics<parallel>], iteration_bounds = array<i64: 1>, scalar_prefetch = 0 : i64, scratch_operands = 0 : i64, tpu.core_type = #tpu.core_type<tc>, window_params = [{transform_indices = @transform_0, window_bounds = array<i64: 8, 12>}, {transform_indices = @transform_1, window_bounds = array<i64: 1, 1, 8>}]} {
    %c0 = arith.constant 0 : index
    %c0_0 = arith.constant 0 : index
    %0 = vector.load %arg1[%c0, %c0_0] : memref<8x12xf32, #tpu.memory_space<vmem>>, vector<8x12xf32>
    %cst = arith.constant dense<0xFF800000> : vector<8xf32>
    %1 = vector.multi_reduction <maximumf>, %0, %cst [1] : vector<8x12xf32> to vector<8xf32>
    %2 = vector.shape_cast %1 : vector<8xf32> to vector<8x1xf32>
    %3 = vector.broadcast %2 : vector<8x1xf32> to vector<8x12xf32>
    %4 = arith.subf %0, %3 : vector<8x12xf32>
    %5 = math.exp %4 : vector<8x12xf32>
    %cst_1 = arith.constant dense<0.000000e+00> : vector<8xf32>
    %6 = vector.multi_reduction <add>, %5, %cst_1 [1] : vector<8x12xf32> to vector<8xf32>
    %7 = vector.shape_cast %6 : vector<8xf32> to vector<8x1xf32>
    %8 = math.log %7 : vector<8x1xf32>
    %9 = arith.addf %2, %8 : vector<8x1xf32>
    %10 = tpu.iota {dimensions = array<i32: 0>} : vector<8x8xi32>
    %11 = tpu.iota {dimensions = array<i32: 1>} : vector<8x8xi32>
    %12 = arith.cmpi eq, %10, %11 : vector<8x8xi32>
    %c8_i32 = arith.constant 8 : i32
    %13 = arith.muli %arg0, %c8_i32 : i32
    %14 = tpu.iota {dimensions = array<i32: 0>} : vector<8x1xi32>
    %15 = vector.broadcast %13 : i32 to vector<8x1xi32>
    %16 = arith.addi %15, %14 : vector<8x1xi32>
    %17 = tpu.iota {dimensions = array<i32: 1>} : vector<8x12xi32>
    %18 = vector.broadcast %16 : vector<8x1xi32> to vector<8x12xi32>
    %19 = arith.cmpi eq, %17, %18 : vector<8x12xi32>
    %cst_2 = arith.constant 0.000000e+00 : f32
    %20 = vector.broadcast %cst_2 : f32 to vector<8x12xf32>
    %21 = arith.select %19, %0, %20 : vector<8x12xi1>, vector<8x12xf32>
    %cst_3 = arith.constant dense<0.000000e+00> : vector<8xf32>
    %22 = vector.multi_reduction <add>, %21, %cst_3 [1] : vector<8x12xf32> to vector<8xf32>
    %23 = vector.shape_cast %22 : vector<8xf32> to vector<8x1xf32>
    %24 = arith.subf %9, %23 : vector<8x1xf32>
    %cst_4 = arith.constant 0.000000e+00 : f32
    %25 = vector.shape_cast %24 : vector<8x1xf32> to vector<8x1xf32>
    %26 = vector.broadcast %25 : vector<8x1xf32> to vector<8x8xf32>
    %27 = vector.broadcast %cst_4 : f32 to vector<8x8xf32>
    %28 = arith.select %12, %26, %27 : vector<8x8xi1>, vector<8x8xf32>
    %cst_5 = arith.constant dense<0.000000e+00> : vector<8xf32>
    %29 = vector.multi_reduction <add>, %28, %cst_5 [0] : vector<8x8xf32> to vector<8xf32>
    %30 = vector.shape_cast %29 : vector<8xf32> to vector<1x8xf32>
    %31 = vector.shape_cast %30 : vector<1x8xf32> to vector<1x1x8xf32>
    %c0_6 = arith.constant 0 : index
    %c0_7 = arith.constant 0 : index
    %c0_8 = arith.constant 0 : index
    %32 = vector.load %arg2[%c0_6, %c0_7, %c0_8] : memref<1x1x8xf32, #tpu.memory_space<vmem>>, vector<1x1x8xf32>
    tpu.vector_store %arg2[%c0_6, %c0_7, %c0_8], %31 {strides = array<i32>} : memref<1x1x8xf32, #tpu.memory_space<vmem>>, vector<1x1x8xf32>,
    return
  }
  func.func @transform_0(%arg0: i32) -> (i32, i32) {
    %c0_i32 = arith.constant 0 : i32
    %c0_i32_0 = arith.constant 0 : i32
    return %arg0, %c0_i32 : i32, i32
  }
  func.func @transform_1(%arg0: i32) -> (i32, i32, i32) {
    %c0_i32 = arith.constant 0 : i32
    %c0_i32_0 = arith.constant 0 : i32
    %c0_i32_1 = arith.constant 0 : i32
    return %arg0, %c0_i32, %c0_i32_0 : i32, i32, i32
  }
}

</mosaic_0001>

<llo_original>
// kernel: tpu_custom_call.1
$region0: #{tpu_custom_call.1}
  #allocation0 [shape = 'u32[]', space=smem, size = 0x4, offset = 0x4, fixed_abs, tag = 'smem constant byte address 0x4 - core index']
  #allocation1 [shape = 'u32[144,128]{1,0:T(1,128)}', space=vmem, size = 0x12000, scoped, tag = 'internal scratch']
  %s0 = inlined_call_operand.hbm [shape: f32[8,12], index: 0, kind: input, shape index: {}]
  %s1 = inlined_call_operand.hbm [shape: f32[1,1,8], index: 1, kind: output, shape index: {}]
  %s2 = sld [smem:[#allocation0]]
  $region18: #{tpu_custom_call.1} parent=0
    _
  %s4 = ssub.s32 1, %s2
  %s5 = scalar_select 0, %s4, %s2
  $region1: #{tpu_custom_call.1} parent=0
    #allocation2 [shape = 'u8[4096]{0}', space=vmem, size = 0x1000, scoped, tag = 'input window, operand 0, single buffered']
    #allocation3 [shape = 's32[1]{0}', space=sflag, size = 0x4, scoped, tag = 'scoped memory for tpu_custom_call.1']
    #allocation4 [shape = 's32[1]{0}', space=sflag, size = 0x4, scoped, tag = 'scoped memory for tpu_custom_call.1']
    #allocation5 [shape = 'u8[512]{0}', space=vmem, size = 0x400, scoped, tag = 'output window, operand 0, single buffered']
    %6 = vsyncpa [#allocation3], 0
    %7 = vsyncpa [#allocation4], 0
    // Predicated region
    $region2: #{tpu_custom_call.1} parent=1 // pred_check
      _
    $region3: #{tpu_custom_call.1} parent=1 // pred_check_branch
      %9 = sbr.rel (0) target = $region5
    $region4: #{tpu_custom_call.1} parent=1 // pred_region
      %s11 = ssub.s32 128, 128
      %12 = vsyncadd [#allocation3], %s11
      %s14 = sshll.u32 [#allocation2], 4
      %s15 = int_to_ptr.vmem [resolvable:$true] %s14
      %17 = dma.hbm_to_vmem [thread:$0]  %s0, 128, %s15, [#allocation3]
    $region5: #{tpu_custom_call.1} parent=1 // pred_fallthru
      _
    // Predicated region
    $region6: #{tpu_custom_call.1} parent=1 // pred_check
      _
    $region7: #{tpu_custom_call.1} parent=1 // pred_check_branch
      %19 = sbr.rel (0) target = $region9
    $region8: #{tpu_custom_call.1} parent=1 // pred_region
      %20 = dma.done [#allocation3], 128
    $region9: #{tpu_custom_call.1} parent=1 // pred_fallthru
      _
    %v21 = vld [vmem:[#allocation2] sm:$0xff]
    %vm22 = vcmask 97280
    %v23 = vsel %vm22, %v21, -inf
    %24 = vmax.xlane.f32.xlu0 %v23
    %v25 = vpop.xlane.xlu0 %24
    %v26 = vsub.f32 %v21, %v25
    %v27 = vmul.f32 %v26, 1.442695
    %v28 = vpow.pop %v27
    %v29 = vsel %vm22, %v28, 0.0
    %30 = vadd.xlane.f32.xlu0 %v29
    %v31 = vpop.xlane.xlu0 %30
    %v32 = vlog2.pop %v31
    %v33 = vmul.f32 %v32, 0.6931472
    %v34 = vadd.f32 %v25, %v33
    %v35 = vlaneseq
    %v36 = vshrl.u32 %v35, 7
    %v37 = vlaneseq
    %v38 = vand.u32 %v37, 127
    %vm39 = vcmp.eq.s32.totalorder %v36, %v38
    %s40 = smul.u32 0, 8
    %v41 = vstv %s40
    %v42 = vadd.s32 %v41, %v36
    %vm43 = vcmp.eq.s32.totalorder %v38, %v42
    %v44 = vsel %vm43, %v21, 0.0
    %v45 = vsel %vm22, %v44, 0.0
    %46 = vadd.xlane.f32.xlu0 %v45
    %v47 = vpop.xlane.xlu0 %46
    %v48 = vsub.f32 %v34, %v47
    %v49 = vsel %vm39, %v48, 0.0
    %vm50 = vcmask 64512
    %v51 = vsel %vm50, %v49, 0.0
    %v52 = vrot.slane %v51, 4
    %v53 = vadd.f32 %v51, %v52
    %v54 = vrot.slane %v53, 2
    %v55 = vadd.f32 %v53, %v54
    %v56 = vrot.slane %v55, 1
    %v57 = vadd.f32 %v55, %v56
    %vm58 = vcmask 57344
    %59 = vst.msk [vmem:[#allocation5] sm:$0x1] %vm58, %v57
    // Predicated region
    $region10: #{tpu_custom_call.1} parent=1 // pred_check
      _
    $region11: #{tpu_custom_call.1} parent=1 // pred_check_branch
      %61 = sbr.rel (0) target = $region13
    $region12: #{tpu_custom_call.1} parent=1 // pred_region
      %s63 = ssub.s32 16, 16
      %64 = vsyncadd [#allocation4], %s63
      %s66 = sshll.u32 [#allocation5], 4
      %s67 = int_to_ptr.vmem [resolvable:$true] %s66
      %69 = dma.vmem_to_hbm [thread:$0]  %s67, 16, %s1, [#allocation4]
    $region13: #{tpu_custom_call.1} parent=1 // pred_fallthru
      _
    // Predicated region
    $region14: #{tpu_custom_call.1} parent=1 // pred_check
      _
    $region15: #{tpu_custom_call.1} parent=1 // pred_check_branch
      %71 = sbr.rel (0) target = $region17
    $region16: #{tpu_custom_call.1} parent=1 // pred_region
      %72 = dma.done [#allocation4], 16
    $region17: #{tpu_custom_call.1} parent=1 // pred_fallthru
      _
    %73 = vsyncpa [#allocation3], 1
    %74 = vsyncpa [#allocation4], 1

</llo_original>
